<compile_context>
chip_gen: v6e
topology: v6e:2x2x1
jax: 0.10.0
libtpu: 0.0.40
codegen_flags: <defaults>
</compile_context>

<pallas_src>
import functools

import jax
import jax.numpy as jnp
from jax.experimental import pallas as pl
from jax.experimental.pallas import tpu as pltpu


def _layernorm1d_kernel(x_ref, gamma_ref, beta_ref, o_ref, *,
                        inv_dim, inv_dim_m1, eps):
    # x_ref: (tile_rows, dim); gamma/beta: (1, dim)
    x = x_ref[...].astype(jnp.float32)

    # Two-pass statistics: mean, then sum of squared deviations.  Numerically
    # robust and effectively free since the tile is already in VMEM.
    mean = jnp.sum(x, axis=-1, keepdims=True) * inv_dim
    xc = x - mean
    # Unbiased variance (ddof=1), matching torch.Tensor.var's default used by
    # the reference module (NOT nn.LayerNorm's biased estimator).
    var = jnp.sum(xc * xc, axis=-1, keepdims=True) * inv_dim_m1
    inv_std = jax.lax.rsqrt(var + eps)  # EUP slot -> essentially free

    gamma = gamma_ref[...].astype(jnp.float32)
    beta = beta_ref[...].astype(jnp.float32)
    o_ref[...] = (gamma * (xc * inv_std) + beta).astype(o_ref.dtype)


def _round_up(v, m):
    return pl.cdiv(v, m) * m


def _vmem_capacity_bytes():
    """Physical VMEM per TensorCore; conservative 64 MiB fallback (v7x)."""
    try:
        info = pltpu.get_tpu_info()
        cap = getattr(info, "vmem_capacity_bytes", None)
        if cap:
            return int(cap)
    except Exception:
        pass
    return 64 << 20


def layernorm1d(x, gamma, beta, eps=1e-5, tile_rows=None,
                target_tile_bytes=None):
    """Row-wise LayerNorm1d. x: (N, dim); gamma/beta: (1, dim). Returns (N, dim)."""
    n, dim = x.shape
    assert gamma.shape == (1, dim) and beta.shape == (1, dim)

    itemsize = x.dtype.itemsize

    # Per-generation VMEM budget: ~48 MiB on v7x (64 MiB/TC), ~96 MiB on
    # v5e/v6e (128 MiB).  Leaves headroom below physical VMEM.
    vmem_cap = _vmem_capacity_bytes()
    vmem_budget = int(max(min(vmem_cap - (16 << 20), 96 << 20), 32 << 20))

    if target_tile_bytes is None:
        # Bigger default tiles on 128 MiB chips (v5e/v6e), smaller on v7x.
        target_tile_bytes = (12 << 20) if vmem_cap >= (100 << 20) else (8 << 20)

    # Row tile: byte-capped (no hard row cap), multiple of 8 sublanes, never
    # larger than the 8-rounded batch.
    if tile_rows is None:
        tile_rows = target_tile_bytes // (dim * itemsize)
    tile_rows = int(min(int(tile_rows), _round_up(n, 8)))
    tile_rows = max(8, (tile_rows // 8) * 8)

    # Per-row VMEM demand: double-buffered input + output tiles in x.dtype plus
    # a few f32 intermediates (upcast x, centered x) materialized in-kernel.
    per_row_bytes = dim * (4 * itemsize + 4 * 4)
    headroom = 2 << 20
    max_rows = max(8, ((vmem_budget - headroom) // per_row_bytes) // 8 * 8)
    tile_rows = int(min(tile_rows, max_rows))
    # TODO(synk): for extremely wide `dim` where even an 8-row tile exceeds the
    # VMEM budget, split the feature dim over a second grid axis with
    # partial-statistics accumulation instead of a single full-width block.

    grid = (pl.cdiv(n, tile_rows),)

    # Size the limit from what the tile actually needs (floor keeps compiler
    # scratch comfortable), never above physical VMEM.
    vmem_limit = int(min(max(tile_rows * per_row_bytes + headroom, 32 << 20),
                         vmem_cap))

    kernel = functools.partial(
        _layernorm1d_kernel,
        inv_dim=float(1.0 / dim),
        # dim == 1: torch.Tensor.var(unbiased=True) on a single element is NaN;
        # propagate NaN to match the reference exactly.
        inv_dim_m1=float(1.0 / (dim - 1)) if dim > 1 else float("nan"),
        eps=float(eps),
    )

    cost = pl.CostEstimate(
        flops=7 * n * dim,
        transcendentals=n,
        bytes_accessed=2 * n * dim * itemsize + 2 * dim * gamma.dtype.itemsize,
    )

    return pl.pallas_call(
        kernel,
        out_shape=jax.ShapeDtypeStruct((n, dim), x.dtype),
        grid_spec=pltpu.PrefetchScalarGridSpec(
            num_scalar_prefetch=0,
            grid=grid,
            in_specs=[
                pl.BlockSpec((tile_rows, dim), lambda i: (i, 0)),  # x tile
                pl.BlockSpec((1, dim), lambda i: (0, 0)),          # gamma (shared)
                pl.BlockSpec((1, dim), lambda i: (0, 0)),          # beta (shared)
            ],
            out_specs=pl.BlockSpec((tile_rows, dim), lambda i: (i, 0)),
        ),
        compiler_params=pltpu.CompilerParams(
            dimension_semantics=("parallel",),  # shards rows across v7x's 2 TCs
            vmem_limit_bytes=vmem_limit,
        ),
        cost_estimate=cost,
    )(x, gamma, beta)


if __name__ == "__main__":
    key = jax.random.PRNGKey(0)
    batch, dim = 8, 32

    x = jax.random.normal(key, (batch, dim), dtype=jnp.float32)

    # Deterministic parameter init, matching nn.Parameter(torch.ones/zeros(1, dim))
    gamma = jnp.ones((1, dim), dtype=jnp.float32)
    beta = jnp.zeros((1, dim), dtype=jnp.float32)

    out = layernorm1d(x, gamma, beta, eps=1e-5)
    out = jax.block_until_ready(out)

    # Reference in plain JAX (unbiased variance, ddof=1, as in torch.var)
    mean = jnp.mean(x, axis=-1, keepdims=True)
    var = jnp.var(x, axis=-1, keepdims=True, ddof=1)
    ref = gamma * ((x - mean) / jnp.sqrt(var + 1e-5)) + beta
    assert out.shape == (batch, dim)
    assert jnp.allclose(out, ref, atol=1e-4, rtol=1e-4), "mismatch vs reference"

    # Ragged shapes (row tail + non-multiple-of-128 feature dim) exercise the
    # masked partial-block path with zero host-side padding/copies.
    x2 = jax.random.normal(jax.random.PRNGKey(1), (13, 48), dtype=jnp.float32)
    g2 = jnp.ones((1, 48), dtype=jnp.float32)
    b2 = jnp.zeros((1, 48), dtype=jnp.float32)
    out2 = jax.block_until_ready(layernorm1d(x2, g2, b2, eps=1e-5))
    m2 = jnp.mean(x2, axis=-1, keepdims=True)
    v2 = jnp.var(x2, axis=-1, keepdims=True, ddof=1)
    ref2 = g2 * ((x2 - m2) / jnp.sqrt(v2 + 1e-5)) + b2
    assert jnp.allclose(out2, ref2, atol=1e-4, rtol=1e-4), "ragged mismatch"

    print("KERNEL_OK")
</pallas_src>

<mosaic_0001>
module attributes {stable_mosaic.version = 11 : i64} {
  func.func @_layernorm1d_kernel(%arg0: i32, %arg1: memref<8x32xf32, #tpu.memory_space<vmem>>, %arg2: memref<1x32xf32, #tpu.memory_space<vmem>>, %arg3: memref<1x32xf32, #tpu.memory_space<vmem>>, %arg4: memref<8x32xf32, #tpu.memory_space<vmem>>) attributes {dimension_semantics = [#tpu.dimension_semantics<parallel>], iteration_bounds = array<i64: 1>, scalar_prefetch = 0 : i64, scratch_operands = 0 : i64, tpu.core_type = #tpu.core_type<tc>, window_params = [{transform_indices = @transform_0, window_bounds = array<i64: 8, 32>}, {pipeline_mode = #tpu.pipeline_mode<synchronous>, transform_indices = @transform_1, window_bounds = array<i64: 1, 32>}, {pipeline_mode = #tpu.pipeline_mode<synchronous>, transform_indices = @transform_2, window_bounds = array<i64: 1, 32>}, {transform_indices = @transform_3, window_bounds = array<i64: 8, 32>}]} {
    %c0 = arith.constant 0 : index
    %c0_0 = arith.constant 0 : index
    %0 = vector.load %arg1[%c0, %c0_0] : memref<8x32xf32, #tpu.memory_space<vmem>>, vector<8x32xf32>
    %cst = arith.constant dense<0.000000e+00> : vector<8xf32>
    %1 = vector.multi_reduction <add>, %0, %cst [1] : vector<8x32xf32> to vector<8xf32>
    %2 = vector.shape_cast %1 : vector<8xf32> to vector<8x1xf32>
    %cst_1 = arith.constant 3.125000e-02 : f32
    %3 = vector.broadcast %cst_1 : f32 to vector<8x1xf32>
    %4 = arith.mulf %2, %3 : vector<8x1xf32>
    %5 = vector.broadcast %4 : vector<8x1xf32> to vector<8x32xf32>
    %6 = arith.subf %0, %5 : vector<8x32xf32>
    %7 = arith.mulf %6, %6 : vector<8x32xf32>
    %cst_2 = arith.constant dense<0.000000e+00> : vector<8xf32>
    %8 = vector.multi_reduction <add>, %7, %cst_2 [1] : vector<8x32xf32> to vector<8xf32>
    %9 = vector.shape_cast %8 : vector<8xf32> to vector<8x1xf32>
    %cst_3 = arith.constant 0.0322580636 : f32
    %10 = vector.broadcast %cst_3 : f32 to vector<8x1xf32>
    %11 = arith.mulf %9, %10 : vector<8x1xf32>
    %cst_4 = arith.constant 9.99999974E-6 : f32
    %12 = vector.broadcast %cst_4 : f32 to vector<8x1xf32>
    %13 = arith.addf %11, %12 : vector<8x1xf32>
    %14 = math.rsqrt %13 : vector<8x1xf32>
    %c0_5 = arith.constant 0 : index
    %c0_6 = arith.constant 0 : index
    %15 = vector.load %arg2[%c0_5, %c0_6] : memref<1x32xf32, #tpu.memory_space<vmem>>, vector<1x32xf32>
    %c0_7 = arith.constant 0 : index
    %c0_8 = arith.constant 0 : index
    %16 = vector.load %arg3[%c0_7, %c0_8] : memref<1x32xf32, #tpu.memory_space<vmem>>, vector<1x32xf32>
    %17 = vector.broadcast %14 : vector<8x1xf32> to vector<8x32xf32>
    %18 = arith.mulf %6, %17 : vector<8x32xf32>
    %19 = vector.broadcast %15 : vector<1x32xf32> to vector<8x32xf32>
    %20 = arith.mulf %19, %18 : vector<8x32xf32>
    %21 = vector.broadcast %16 : vector<1x32xf32> to vector<8x32xf32>
    %22 = arith.addf %20, %21 : vector<8x32xf32>
    %c0_9 = arith.constant 0 : index
    %c0_10 = arith.constant 0 : index
    %23 = vector.load %arg4[%c0_9, %c0_10] : memref<8x32xf32, #tpu.memory_space<vmem>>, vector<8x32xf32>
    tpu.vector_store %arg4[%c0_9, %c0_10], %22 {strides = array<i32>} : memref<8x32xf32, #tpu.memory_space<vmem>>, vector<8x32xf32>,
    return
  }
  func.func @transform_0(%arg0: i32) -> (i32, i32) {
    %c0_i32 = arith.constant 0 : i32
    %c0_i32_0 = arith.constant 0 : i32
    return %arg0, %c0_i32 : i32, i32
  }
  func.func @transform_1(%arg0: i32) -> (i32, i32) {
    %c0_i32 = arith.constant 0 : i32
    %c0_i32_0 = arith.constant 0 : i32
    %c0_i32_1 = arith.constant 0 : i32
    return %c0_i32, %c0_i32_0 : i32, i32
  }
  func.func @transform_2(%arg0: i32) -> (i32, i32) {
    %c0_i32 = arith.constant 0 : i32
    %c0_i32_0 = arith.constant 0 : i32
    %c0_i32_1 = arith.constant 0 : i32
    return %c0_i32, %c0_i32_0 : i32, i32
  }
  func.func @transform_3(%arg0: i32) -> (i32, i32) {
    %c0_i32 = arith.constant 0 : i32
    %c0_i32_0 = arith.constant 0 : i32
    return %arg0, %c0_i32 : i32, i32
  }
}

</mosaic_0001>

<llo_original>
// kernel: tpu_custom_call.1
$region0: #{tpu_custom_call.1}
  #allocation0 [shape = 'u32[]', space=smem, size = 0x4, offset = 0x4, fixed_abs, tag = 'smem constant byte address 0x4 - core index']
  #allocation1 [shape = 'u32[144,128]{1,0:T(1,128)}', space=vmem, size = 0x12000, scoped, tag = 'internal scratch']
  %s0 = inlined_call_operand.hbm [shape: f32[8,32], index: 0, kind: input, shape index: {}]
  %s1 = inlined_call_operand.vmem [shape: f32[1,32], index: 1, kind: input, shape index: {}]
  %s2 = inlined_call_operand.vmem [shape: f32[1,32], index: 2, kind: input, shape index: {}]
  %s3 = inlined_call_operand.hbm [shape: f32[8,32], index: 3, kind: output, shape index: {}]
  %s4 = sld [smem:[#allocation0]]
  $region26: #{tpu_custom_call.1} parent=0
    _
  %s6 = ssub.s32 1, %s4
  %s7 = scalar_select 0, %s6, %s4
  $region1: #{tpu_custom_call.1} parent=0
    #allocation2 [shape = 'u8[4096]{0}', space=vmem, size = 0x1000, scoped, tag = 'input window, operand 0, single buffered']
    #allocation3 [shape = 's32[1]{0}', space=sflag, size = 0x4, scoped, tag = 'scoped memory for tpu_custom_call.1']
    #allocation4 [shape = 's32[1]{0}', space=sflag, size = 0x4, scoped, tag = 'scoped memory for tpu_custom_call.1']
    #allocation5 [shape = 'u8[4096]{0}', space=vmem, size = 0x1000, scoped, tag = 'output window, operand 0, single buffered']
    %8 = vsyncpa [#allocation3], 0
    %9 = vsyncpa [#allocation4], 0
    // Predicated region
    $region2: #{tpu_custom_call.1} parent=1 // pred_check
      _
    $region3: #{tpu_custom_call.1} parent=1 // pred_check_branch
      %11 = sbr.rel (0) target = $region5
    $region4: #{tpu_custom_call.1} parent=1 // pred_region
      %s13 = ssub.s32 128, 128
      %14 = vsyncadd [#allocation3], %s13
      %s16 = sshll.u32 [#allocation2], 4
      %s17 = int_to_ptr.vmem [resolvable:$true] %s16
      %19 = dma.hbm_to_vmem [thread:$0]  %s0, 128, %s17, [#allocation3]
    $region5: #{tpu_custom_call.1} parent=1 // pred_fallthru
      _
    // Predicated region
    $region6: #{tpu_custom_call.1} parent=1 // pred_check
      _
    $region7: #{tpu_custom_call.1} parent=1 // pred_check_branch
      %21 = sbr.rel (0) target = $region9
    $region8: #{tpu_custom_call.1} parent=1 // pred_region
      _
    $region9: #{tpu_custom_call.1} parent=1 // pred_fallthru
      _
    // Predicated region
    $region10: #{tpu_custom_call.1} parent=1 // pred_check
      _
    $region11: #{tpu_custom_call.1} parent=1 // pred_check_branch
      %23 = sbr.rel (0) target = $region13
    $region12: #{tpu_custom_call.1} parent=1 // pred_region
      _
    $region13: #{tpu_custom_call.1} parent=1 // pred_fallthru
      _
    // Predicated region
    $region14: #{tpu_custom_call.1} parent=1 // pred_check
      _
    $region15: #{tpu_custom_call.1} parent=1 // pred_check_branch
      %25 = sbr.rel (0) target = $region17
    $region16: #{tpu_custom_call.1} parent=1 // pred_region
      %26 = dma.done [#allocation3], 128
    $region17: #{tpu_custom_call.1} parent=1 // pred_fallthru
      _
    %v27 = vld [vmem:[#allocation2] sm:$0xff]
    %vm28 = vcmask 261120
    %v29 = vsel %vm28, %v27, 0.0
    %30 = vadd.xlane.f32.xlu0 %v29
    %v31 = vpop.xlane.xlu0 %30
    %v32 = vmul.f32 %v31, 0.03125
    %v33 = vsub.f32 %v27, %v32
    %v34 = vmul.f32 %v33, %v33
    %v35 = vsel %vm28, %v34, 0.0
    %36 = vadd.xlane.f32.xlu0 %v35
    %v37 = vpop.xlane.xlu0 %36
    %v38 = vmul.f32 %v37, 0.032258064
    %v39 = vadd.f32 %v38, 1e-05
    %v40 = vrsqrt.pop %v39
    %v41 = vld [vmem:[%s1] sm:$0x1]
    %v42 = vld [vmem:[%s2] sm:$0x1]
    %v43 = vmul.f32 %v33, %v40
    %v45 = vlaneseq
    %v46 = vshrl.u32 %v45, 7
    %v47 = vsub.s32 0, %v46
    %v48 = vrot.slane %v41, %v47
    %v50 = vmul.f32 %v48, %v43
    %v52 = vlaneseq
    %v53 = vshrl.u32 %v52, 7
    %v54 = vsub.s32 0, %v53
    %v55 = vrot.slane %v42, %v54
    %v57 = vadd.f32 %v50, %v55
    %58 = vst.msk [vmem:[#allocation5] sm:$0xff] %vm28, %v57
    // Predicated region
    $region18: #{tpu_custom_call.1} parent=1 // pred_check
      _
    $region19: #{tpu_custom_call.1} parent=1 // pred_check_branch
      %60 = sbr.rel (0) target = $region21
    $region20: #{tpu_custom_call.1} parent=1 // pred_region
      %s62 = ssub.s32 128, 128
      %63 = vsyncadd [#allocation4], %s62
      %s65 = sshll.u32 [#allocation5], 4
      %s66 = int_to_ptr.vmem [resolvable:$true] %s65
      %68 = dma.vmem_to_hbm [thread:$0]  %s66, 128, %s3, [#allocation4]
    $region21: #{tpu_custom_call.1} parent=1 // pred_fallthru
      _
    // Predicated region
    $region22: #{tpu_custom_call.1} parent=1 // pred_check
      _
    $region23: #{tpu_custom_call.1} parent=1 // pred_check_branch
      %70 = sbr.rel (0) target = $region25
    $region24: #{tpu_custom_call.1} parent=1 // pred_region
      %71 = dma.done [#allocation4], 128
    $region25: #{tpu_custom_call.1} parent=1 // pred_fallthru
      _
    %72 = vsyncpa [#allocation3], 1
    %73 = vsyncpa [#allocation4], 1

</llo_original>
